<compile_context>
chip_gen: v7x
topology: tpu7x:2x2x1
jax: 0.10.0
libtpu: 0.0.40
codegen_flags: <defaults>
</compile_context>

<pallas_src>
import jax
import jax.numpy as jnp
from jax.experimental import pallas as pl
from jax.experimental.pallas import tpu as pltpu


# ---------------------------------------------------------------------------
# Optional Pallas kernel: explicit materialization of the constant into a new
# buffer via a single HBM -> HBM DMA (no VMEM staging).
# ---------------------------------------------------------------------------
def _hbm_copy_kernel(value_ref, out_ref, sem):
    copy = pltpu.make_async_copy(value_ref, out_ref, sem)
    copy.start()
    copy.wait()


def constant_materialize(value):
    """Copy `value` into a freshly allocated buffer with one HBM->HBM DMA.

    Only `value` is touched (the ignored activation never reaches the kernel).
    Both refs live in HBM (`pl.ANY`), so there is no VMEM round-trip, no
    scoped-VMEM ceiling, and no (8,128) blocking constraint — the copy is
    purely DMA-engine / HBM-bandwidth bound on all generations.
    """
    nbytes = value.size * value.dtype.itemsize
    return pl.pallas_call(
        _hbm_copy_kernel,
        out_shape=jax.ShapeDtypeStruct(value.shape, value.dtype),
        in_specs=[pl.BlockSpec(memory_space=pl.ANY)],
        out_specs=pl.BlockSpec(memory_space=pl.ANY),
        scratch_shapes=[pltpu.SemaphoreType.DMA(())],
        cost_estimate=pl.CostEstimate(
            flops=0, transcendentals=0, bytes_accessed=2 * nbytes
        ),
    )(value)


# ---------------------------------------------------------------------------
# Module forward: Constant.forward(x) -> self.value
# ---------------------------------------------------------------------------
def constant_forward(x, value, materialize=False):
    """Pallas equivalent of Constant.forward: returns `value`, ignores `x`.

    Default path returns `value` directly (zero kernel-launch overhead).
    Set materialize=True only if a caller explicitly needs a *distinct*
    output buffer produced through a Pallas custom call; plain XLA
    (jnp.copy) is otherwise preferable since it can be fused/elided.
    """
    del x  # forward ignores its input
    if materialize:
        return constant_materialize(value)
    return value


# ---------------------------------------------------------------------------
# Mirror of Constant.__init__'s tensor coercion:
#   * list        -> tensor (inferred dtype), unsqueezed to >= 4-D
#   * scalar      -> (1, 1, 1, 1) float32
#   * array-like  -> passed through unchanged (rank and dtype preserved)
# ---------------------------------------------------------------------------
def make_constant_value(tensor):
    if isinstance(tensor, (list, tuple)):
        arr = jnp.asarray(tensor)
        while arr.ndim < 4:
            arr = arr[None, ...]
        return arr
    if isinstance(tensor, (int, float)):
        return jnp.full((1, 1, 1, 1), float(tensor), dtype=jnp.float32)
    return jnp.asarray(tensor)


if __name__ == "__main__":
    key = jax.random.PRNGKey(0)
    k_x, k_v = jax.random.split(key)

    # Small deterministic example input (NCHW) — ignored by forward.
    x = jax.random.normal(k_x, (2, 4, 16, 16), dtype=jnp.float32)

    # Constant(tensor) with a lane-dense parameter: (16, 128) f32.
    value = make_constant_value(
        jax.random.normal(k_v, (16, 128), dtype=jnp.float32)
    )

    # Fast path (recommended): forward is the identity on `value`.
    out_fast = constant_forward(x, value)
    assert out_fast is value  # zero-cost identity, no copy, no kernel

    # Pallas path: explicit materialized copy via a single HBM->HBM DMA.
    out_kernel = jax.block_until_ready(constant_forward(x, value, materialize=True))
    assert out_kernel.shape == value.shape and out_kernel.dtype == value.dtype
    assert bool(jnp.allclose(out_kernel, value))

    # Scalar-style constant (1,1,1,1), as produced by Constant(3.5) — the
    # HBM->HBM DMA path has no blocking constraints, so it handles this too.
    scalar_value = make_constant_value(3.5)
    out_scalar = jax.block_until_ready(
        constant_forward(x, scalar_value, materialize=True)
    )
    assert out_scalar.shape == (1, 1, 1, 1)
    assert bool(jnp.allclose(out_scalar, scalar_value))

    print("KERNEL_OK")
</pallas_src>

<mosaic_0001>
module attributes {stable_mosaic.version = 11 : i64} {
  func.func @_hbm_copy_kernel(%arg0: memref<16x128xf32, #tpu.memory_space<any>>, %arg1: memref<16x128xf32, #tpu.memory_space<any>>, %arg2: memref<!tpu.dma_semaphore, #tpu.memory_space<semaphore_mem>>) attributes {dimension_semantics = [], scalar_prefetch = 0 : i64, scratch_operands = 1 : i64, tpu.core_type = #tpu.core_type<tc>} {
    tpu.enqueue_dma source(%arg0 : memref<16x128xf32, #tpu.memory_space<any>>) target(%arg1 : memref<16x128xf32, #tpu.memory_space<any>>) target_semaphore(%arg2 : memref<!tpu.dma_semaphore, #tpu.memory_space<semaphore_mem>>)
    tpu.wait_dma2 semaphore(%arg2 : memref<!tpu.dma_semaphore, #tpu.memory_space<semaphore_mem>>) src(%arg0 : memref<16x128xf32, #tpu.memory_space<any>>) dst(%arg1 : memref<16x128xf32, #tpu.memory_space<any>>)
    return
  }
}

</mosaic_0001>

<llo_original>
// kernel: tpu_custom_call.1
$region0: #{tpu_custom_call.1}
  #allocation0 [shape = 'u32[]', space=smem, size = 0x4, offset = 0x4, fixed_abs, tag = 'smem constant byte address 0x4 - core index']
  #allocation1 [shape = 'u32[144,128]{1,0:T(1,128)}', space=vmem, size = 0x12000, scoped, tag = 'internal scratch']
  #allocation2 [shape = 's32[1]{0}', space=sflag, size = 0x4, scoped, tag = 'scratch operand']
  #allocation3 [shape = 's32[]', space=sflag, size = 0x4, offset = 0, fixed_abs, tag = 'sflag constant byte address 0x0 - dummy sync flag']
  #allocation4 [shape = 'u32[0]{0}', space=smem, size = 0, offset = 0, fixed_abs, tag = 'smem constant byte address 0x0 - null']
  %s0 = inlined_call_operand.hbm [shape: f32[16,128], index: 0, kind: input, shape index: {}]
  %s1 = inlined_call_operand.hbm [shape: f32[16,128], index: 1, kind: output, shape index: {}]
  %s2 = sld [smem:[#allocation0]]
  $region2: #{tpu_custom_call.1} parent=0
    _
  %s4 = ssub.s32 1, %s2
  %s5 = scalar_select 0, %s4, %s2
  %s7 = sshll.u32 1, 14
  %s8 = sxor.u32 4294967295, %s7
  %s11 = sshll.u32 3, 24
  %s12 = sxor.u32 4294967295, %s11
  %s13 = sand.u32 0, %s12
  %s15 = sor.u32 %s13, 0
  %18 = dma.general %s0, 256, %s1, [#allocation2], [#allocation3], [#allocation4], %s15, 0
  %s19 = smul.u32 16, 1
  %s20 = sshll.u32 %s19, 4
  %21 = dma.done [#allocation2], %s20
  %22 = vsyncmov [#allocation2]
  %s23 = vpop.sfrf %22
  %p24 = scmp.eq.s32.totalorder %s23, 0
  %p25 = pneg %p24
  %27 = shalt.err (%p25)

</llo_original>
